<compile_context>
chip_gen: v5e
topology: v5e:2x2
jax: 0.10.0
libtpu: 0.0.40
codegen_flags: <defaults>
</compile_context>

<pallas_src>
import functools

import jax
import jax.numpy as jnp
from jax.experimental import pallas as pl
from jax.experimental.pallas import tpu as pltpu


def _choose_tiles(B, C, H, W, itemsize, target_bytes):
    """Pick (batch_tile, h_tile) so each grid step streams ~target_bytes of x.

    Constraints: h_tile is a multiple of 8 or equals H (TPU (8,128) block rule;
    W is always kept whole so the NCHW array is blocked directly with no
    wrapper reshape / pad / slice), and both tiles divide their axes so there
    is no ragged grid edge.
    """
    batch_bytes = C * H * W * itemsize
    bt, th = 1, H
    if batch_bytes >= target_bytes:
        if H % 8 == 0:
            row_bytes = C * W * itemsize  # one H-row across all channels
            th = max(8, min(H, (target_bytes // max(row_bytes, 1)) // 8 * 8))
            while H % th:
                th -= 8
        # else: H cannot be split cleanly -> keep the full-H block.
        # TODO(synk): handle ragged H (H % 8 != 0 with huge H*W) via an
        # in-kernel masked tail instead of a full-H block.
    else:
        bt = min(B, max(1, target_bytes // batch_bytes))
        while B % bt:
            bt -= 1
    # Keep >= 2 grid steps when possible so megacore (v7x) has work to split.
    if (B // bt) * (H // th) < 2:
        if bt > 1:
            bt = max(1, bt // 2)
            while B % bt:
                bt -= 1
        elif th == H and H % 16 == 0 and H > 8:
            th = H // 2
    return bt, th


def _residual_mix_kernel(x_ref, w_ref, b_ref, o_ref, *, C, approximate):
    # x_ref / o_ref: (bt, C, th, W) VMEM blocks in the activation dtype.
    # w_ref: (C, C) f32 in SMEM; b_ref: (C,) f32 in SMEM.
    # Channel mix as C*C unrolled VPU FMAs over dense (bt, th, W) slabs,
    # f32 elementwise math throughout (no bf16 VPU dependence -> v5e-safe).
    xs = [x_ref[:, k, :, :].astype(jnp.float32) for k in range(C)]
    for c in range(C):
        y = xs[0] * w_ref[c, 0]
        for k in range(1, C):
            y = y + xs[k] * w_ref[c, k]
        y = y + b_ref[c]
        y = jax.nn.gelu(y, approximate=approximate)      # tanh -> EUP
        o_ref[:, c, :, :] = (y + xs[c]).astype(o_ref.dtype)


def residual_add(x, w, b, *, target_block_bytes=2 << 20, exact_gelu=False):
    """ResidualAdd(fn) forward with fn = GELU(1x1 conv over channels), fused.

    x: (B, C, H, W).  w: (C, C).  b: (C,).  Returns (B, C, H, W) in x.dtype.
    """
    B, C, H, W = x.shape
    assert w.shape == (C, C) and b.shape == (C,)

    itemsize = jnp.dtype(x.dtype).itemsize
    bt, th = _choose_tiles(B, C, H, W, itemsize, target_block_bytes)
    grid = (B // bt, H // th)

    kernel = functools.partial(
        _residual_mix_kernel, C=C, approximate=not exact_gelu)

    blk = lambda bi, hi: (bi, 0, hi, 0)

    cost = pl.CostEstimate(
        flops=(2 * C + 4) * B * C * H * W,
        transcendentals=B * C * H * W,
        bytes_accessed=2 * B * C * H * W * itemsize + (C * C + C) * 4,
    )

    return pl.pallas_call(
        kernel,
        out_shape=jax.ShapeDtypeStruct((B, C, H, W), x.dtype),
        grid_spec=pltpu.PrefetchScalarGridSpec(
            num_scalar_prefetch=0,
            grid=grid,
            in_specs=[
                # Streaming activations: batch kept in the block, full channel
                # extent, full-W rows -> NCHW blocked directly (no reshapes).
                pl.BlockSpec((bt, C, th, W), blk),
                # Tiny weights / bias live in SMEM and are read as scalars.
                pl.BlockSpec(memory_space=pltpu.MemorySpace.SMEM),
                pl.BlockSpec(memory_space=pltpu.MemorySpace.SMEM),
            ],
            out_specs=pl.BlockSpec((bt, C, th, W), blk),
        ),
        compiler_params=pltpu.CompilerParams(
            dimension_semantics=("parallel", "parallel"),
            vmem_limit_bytes=32 * 1024 * 1024,
        ),
        cost_estimate=cost,
    )(x, w.astype(jnp.float32), b.astype(jnp.float32))


def _reference(x, w, b, exact_gelu=False):
    # Pure-JAX reference mirroring the kernel math: f32 channel mix, GELU,
    # residual add, cast back to the input dtype.
    xf = x.astype(jnp.float32)
    y = jnp.einsum("ck,bkhw->bchw", w.astype(jnp.float32), xf,
                   precision=jax.lax.Precision.HIGHEST)
    y = y + b.astype(jnp.float32).reshape(1, -1, 1, 1)
    y = jax.nn.gelu(y, approximate=not exact_gelu)
    return (y + xf).astype(x.dtype)


if __name__ == "__main__":
    key = jax.random.PRNGKey(0)
    kx, kw, kb, kx2 = jax.random.split(key, 4)

    # Small NCHW shapes consistent with the ResidualAdd usage.
    B, C, H, W = 2, 4, 16, 16
    x = jax.random.normal(kx, (B, C, H, W), dtype=jnp.float32)
    w = jax.random.normal(kw, (C, C), dtype=jnp.float32) * 0.1
    b = jax.random.normal(kb, (C,), dtype=jnp.float32) * 0.1

    out = jax.block_until_ready(residual_add(x, w, b))
    ref = _reference(x, w, b)
    assert out.shape == (B, C, H, W)
    assert out.dtype == x.dtype
    assert jnp.allclose(out, ref, atol=1e-4, rtol=1e-4), "mismatch vs reference"

    # Second shape exercises a batch-tiled block (bt > 1) and a 128-wide lane dim.
    B2, C2, H2, W2 = 4, 4, 24, 128
    x2 = jax.random.normal(kx2, (B2, C2, H2, W2), dtype=jnp.float32)
    out2 = jax.block_until_ready(residual_add(x2, w, b))
    ref2 = _reference(x2, w, b)
    assert jnp.allclose(out2, ref2, atol=1e-4, rtol=1e-4), "mismatch (tiled path)"

    print("KERNEL_OK")
</pallas_src>

<mosaic_0001>
module attributes {stable_mosaic.version = 11 : i64} {
  func.func @_residual_mix_kernel(%arg0: i32, %arg1: i32, %arg2: memref<1x4x16x16xf32, #tpu.memory_space<vmem>>, %arg3: memref<4x4xf32, #tpu.memory_space<smem>>, %arg4: memref<4xf32, #tpu.memory_space<smem>>, %arg5: memref<1x4x16x16xf32, #tpu.memory_space<vmem>>) attributes {dimension_semantics = [#tpu.dimension_semantics<parallel>, #tpu.dimension_semantics<parallel>], iteration_bounds = array<i64: 2, 1>, scalar_prefetch = 0 : i64, scratch_operands = 0 : i64, tpu.core_type = #tpu.core_type<tc>, window_params = [{transform_indices = @transform_0, window_bounds = array<i64: 1, 4, 16, 16>}, {transform_indices = @transform_1, window_bounds = array<i64: 4, 4>}, {transform_indices = @transform_2, window_bounds = array<i64: 4>}, {transform_indices = @transform_3, window_bounds = array<i64: 1, 4, 16, 16>}]} {
    %c0 = arith.constant 0 : index
    %c0_0 = arith.constant 0 : index
    %c0_1 = arith.constant 0 : index
    %c0_2 = arith.constant 0 : index
    %0 = vector.load %arg2[%c0, %c0_0, %c0_1, %c0_2] : memref<1x4x16x16xf32, #tpu.memory_space<vmem>>, vector<1x1x16x16xf32>
    %1 = vector.shape_cast %0 : vector<1x1x16x16xf32> to vector<1x16x16xf32>
    %c0_3 = arith.constant 0 : index
    %c1 = arith.constant 1 : index
    %c0_4 = arith.constant 0 : index
    %c0_5 = arith.constant 0 : index
    %2 = vector.load %arg2[%c0_3, %c1, %c0_4, %c0_5] : memref<1x4x16x16xf32, #tpu.memory_space<vmem>>, vector<1x1x16x16xf32>
    %3 = vector.shape_cast %2 : vector<1x1x16x16xf32> to vector<1x16x16xf32>
    %c0_6 = arith.constant 0 : index
    %c2 = arith.constant 2 : index
    %c0_7 = arith.constant 0 : index
    %c0_8 = arith.constant 0 : index
    %4 = vector.load %arg2[%c0_6, %c2, %c0_7, %c0_8] : memref<1x4x16x16xf32, #tpu.memory_space<vmem>>, vector<1x1x16x16xf32>
    %5 = vector.shape_cast %4 : vector<1x1x16x16xf32> to vector<1x16x16xf32>
    %c0_9 = arith.constant 0 : index
    %c3 = arith.constant 3 : index
    %c0_10 = arith.constant 0 : index
    %c0_11 = arith.constant 0 : index
    %6 = vector.load %arg2[%c0_9, %c3, %c0_10, %c0_11] : memref<1x4x16x16xf32, #tpu.memory_space<vmem>>, vector<1x1x16x16xf32>
    %7 = vector.shape_cast %6 : vector<1x1x16x16xf32> to vector<1x16x16xf32>
    %c0_12 = arith.constant 0 : index
    %c0_13 = arith.constant 0 : index
    %8 = memref.load %arg3[%c0_12, %c0_13] : memref<4x4xf32, #tpu.memory_space<smem>>
    %9 = vector.broadcast %8 : f32 to vector<1x16x16xf32>
    %10 = arith.mulf %1, %9 : vector<1x16x16xf32>
    %c0_14 = arith.constant 0 : index
    %c1_15 = arith.constant 1 : index
    %11 = memref.load %arg3[%c0_14, %c1_15] : memref<4x4xf32, #tpu.memory_space<smem>>
    %12 = vector.broadcast %11 : f32 to vector<1x16x16xf32>
    %13 = arith.mulf %3, %12 : vector<1x16x16xf32>
    %14 = arith.addf %10, %13 : vector<1x16x16xf32>
    %c0_16 = arith.constant 0 : index
    %c2_17 = arith.constant 2 : index
    %15 = memref.load %arg3[%c0_16, %c2_17] : memref<4x4xf32, #tpu.memory_space<smem>>
    %16 = vector.broadcast %15 : f32 to vector<1x16x16xf32>
    %17 = arith.mulf %5, %16 : vector<1x16x16xf32>
    %18 = arith.addf %14, %17 : vector<1x16x16xf32>
    %c0_18 = arith.constant 0 : index
    %c3_19 = arith.constant 3 : index
    %19 = memref.load %arg3[%c0_18, %c3_19] : memref<4x4xf32, #tpu.memory_space<smem>>
    %20 = vector.broadcast %19 : f32 to vector<1x16x16xf32>
    %21 = arith.mulf %7, %20 : vector<1x16x16xf32>
    %22 = arith.addf %18, %21 : vector<1x16x16xf32>
    %c0_20 = arith.constant 0 : index
    %23 = memref.load %arg4[%c0_20] : memref<4xf32, #tpu.memory_space<smem>>
    %24 = vector.broadcast %23 : f32 to vector<1x16x16xf32>
    %25 = arith.addf %22, %24 : vector<1x16x16xf32>
    %26 = arith.mulf %25, %25 : vector<1x16x16xf32>
    %27 = arith.mulf %25, %26 : vector<1x16x16xf32>
    %cst = arith.constant 4.471500e-02 : f32
    %28 = vector.broadcast %cst : f32 to vector<1x16x16xf32>
    %29 = arith.mulf %28, %27 : vector<1x16x16xf32>
    %30 = arith.addf %25, %29 : vector<1x16x16xf32>
    %cst_21 = arith.constant 0.797884583 : f32
    %31 = vector.broadcast %cst_21 : f32 to vector<1x16x16xf32>
    %32 = arith.mulf %31, %30 : vector<1x16x16xf32>
    %33 = math.tanh %32 : vector<1x16x16xf32>
    %cst_22 = arith.constant 1.000000e+00 : f32
    %34 = vector.broadcast %cst_22 : f32 to vector<1x16x16xf32>
    %35 = arith.addf %34, %33 : vector<1x16x16xf32>
    %cst_23 = arith.constant 5.000000e-01 : f32
    %36 = vector.broadcast %cst_23 : f32 to vector<1x16x16xf32>
    %37 = arith.mulf %36, %35 : vector<1x16x16xf32>
    %38 = arith.mulf %25, %37 : vector<1x16x16xf32>
    %39 = arith.addf %38, %1 : vector<1x16x16xf32>
    %c0_24 = arith.constant 0 : index
    %c0_25 = arith.constant 0 : index
    %c0_26 = arith.constant 0 : index
    %c0_27 = arith.constant 0 : index
    %40 = vector.load %arg5[%c0_24, %c0_25, %c0_26, %c0_27] : memref<1x4x16x16xf32, #tpu.memory_space<vmem>>, vector<1x1x16x16xf32>
    %41 = vector.shape_cast %40 : vector<1x1x16x16xf32> to vector<1x16x16xf32>
    %42 = vector.shape_cast %39 : vector<1x16x16xf32> to vector<1x1x16x16xf32>
    tpu.vector_store %arg5[%c0_24, %c0_25, %c0_26, %c0_27], %42 {strides = array<i32>} : memref<1x4x16x16xf32, #tpu.memory_space<vmem>>, vector<1x1x16x16xf32>,
    %c1_28 = arith.constant 1 : index
    %c0_29 = arith.constant 0 : index
    %43 = memref.load %arg3[%c1_28, %c0_29] : memref<4x4xf32, #tpu.memory_space<smem>>
    %44 = vector.broadcast %43 : f32 to vector<1x16x16xf32>
    %45 = arith.mulf %1, %44 : vector<1x16x16xf32>
    %c1_30 = arith.constant 1 : index
    %c1_31 = arith.constant 1 : index
    %46 = memref.load %arg3[%c1_30, %c1_31] : memref<4x4xf32, #tpu.memory_space<smem>>
    %47 = vector.broadcast %46 : f32 to vector<1x16x16xf32>
    %48 = arith.mulf %3, %47 : vector<1x16x16xf32>
    %49 = arith.addf %45, %48 : vector<1x16x16xf32>
    %c1_32 = arith.constant 1 : index
    %c2_33 = arith.constant 2 : index
    %50 = memref.load %arg3[%c1_32, %c2_33] : memref<4x4xf32, #tpu.memory_space<smem>>
    %51 = vector.broadcast %50 : f32 to vector<1x16x16xf32>
    %52 = arith.mulf %5, %51 : vector<1x16x16xf32>
    %53 = arith.addf %49, %52 : vector<1x16x16xf32>
    %c1_34 = arith.constant 1 : index
    %c3_35 = arith.constant 3 : index
    %54 = memref.load %arg3[%c1_34, %c3_35] : memref<4x4xf32, #tpu.memory_space<smem>>
    %55 = vector.broadcast %54 : f32 to vector<1x16x16xf32>
    %56 = arith.mulf %7, %55 : vector<1x16x16xf32>
    %57 = arith.addf %53, %56 : vector<1x16x16xf32>
    %c1_36 = arith.constant 1 : index
    %58 = memref.load %arg4[%c1_36] : memref<4xf32, #tpu.memory_space<smem>>
    %59 = vector.broadcast %58 : f32 to vector<1x16x16xf32>
    %60 = arith.addf %57, %59 : vector<1x16x16xf32>
    %61 = arith.mulf %60, %60 : vector<1x16x16xf32>
    %62 = arith.mulf %60, %61 : vector<1x16x16xf32>
    %cst_37 = arith.constant 4.471500e-02 : f32
    %63 = vector.broadcast %cst_37 : f32 to vector<1x16x16xf32>
    %64 = arith.mulf %63, %62 : vector<1x16x16xf32>
    %65 = arith.addf %60, %64 : vector<1x16x16xf32>
    %cst_38 = arith.constant 0.797884583 : f32
    %66 = vector.broadcast %cst_38 : f32 to vector<1x16x16xf32>
    %67 = arith.mulf %66, %65 : vector<1x16x16xf32>
    %68 = math.tanh %67 : vector<1x16x16xf32>
    %cst_39 = arith.constant 1.000000e+00 : f32
    %69 = vector.broadcast %cst_39 : f32 to vector<1x16x16xf32>
    %70 = arith.addf %69, %68 : vector<1x16x16xf32>
    %cst_40 = arith.constant 5.000000e-01 : f32
    %71 = vector.broadcast %cst_40 : f32 to vector<1x16x16xf32>
    %72 = arith.mulf %71, %70 : vector<1x16x16xf32>
    %73 = arith.mulf %60, %72 : vector<1x16x16xf32>
    %74 = arith.addf %73, %3 : vector<1x16x16xf32>
    %c0_41 = arith.constant 0 : index
    %c1_42 = arith.constant 1 : index
    %c0_43 = arith.constant 0 : index
    %c0_44 = arith.constant 0 : index
    %75 = vector.load %arg5[%c0_41, %c1_42, %c0_43, %c0_44] : memref<1x4x16x16xf32, #tpu.memory_space<vmem>>, vector<1x1x16x16xf32>
    %76 = vector.shape_cast %75 : vector<1x1x16x16xf32> to vector<1x16x16xf32>
    %77 = vector.shape_cast %74 : vector<1x16x16xf32> to vector<1x1x16x16xf32>
    tpu.vector_store %arg5[%c0_41, %c1_42, %c0_43, %c0_44], %77 {strides = array<i32>} : memref<1x4x16x16xf32, #tpu.memory_space<vmem>>, vector<1x1x16x16xf32>,
    %c2_45 = arith.constant 2 : index
    %c0_46 = arith.constant 0 : index
    %78 = memref.load %arg3[%c2_45, %c0_46] : memref<4x4xf32, #tpu.memory_space<smem>>
    %79 = vector.broadcast %78 : f32 to vector<1x16x16xf32>
    %80 = arith.mulf %1, %79 : vector<1x16x16xf32>
    %c2_47 = arith.constant 2 : index
    %c1_48 = arith.constant 1 : index
    %81 = memref.load %arg3[%c2_47, %c1_48] : memref<4x4xf32, #tpu.memory_space<smem>>
    %82 = vector.broadcast %81 : f32 to vector<1x16x16xf32>
    %83 = arith.mulf %3, %82 : vector<1x16x16xf32>
    %84 = arith.addf %80, %83 : vector<1x16x16xf32>
    %c2_49 = arith.constant 2 : index
    %c2_50 = arith.constant 2 : index
    %85 = memref.load %arg3[%c2_49, %c2_50] : memref<4x4xf32, #tpu.memory_space<smem>>
    %86 = vector.broadcast %85 : f32 to vector<1x16x16xf32>
    %87 = arith.mulf %5, %86 : vector<1x16x16xf32>
    %88 = arith.addf %84, %87 : vector<1x16x16xf32>
    %c2_51 = arith.constant 2 : index
    %c3_52 = arith.constant 3 : index
    %89 = memref.load %arg3[%c2_51, %c3_52] : memref<4x4xf32, #tpu.memory_space<smem>>
    %90 = vector.broadcast %89 : f32 to vector<1x16x16xf32>
    %91 = arith.mulf %7, %90 : vector<1x16x16xf32>
    %92 = arith.addf %88, %91 : vector<1x16x16xf32>
    %c2_53 = arith.constant 2 : index
    %93 = memref.load %arg4[%c2_53] : memref<4xf32, #tpu.memory_space<smem>>
    %94 = vector.broadcast %93 : f32 to vector<1x16x16xf32>
    %95 = arith.addf %92, %94 : vector<1x16x16xf32>
    %96 = arith.mulf %95, %95 : vector<1x16x16xf32>
    %97 = arith.mulf %95, %96 : vector<1x16x16xf32>
    %cst_54 = arith.constant 4.471500e-02 : f32
    %98 = vector.broadcast %cst_54 : f32 to vector<1x16x16xf32>
    %99 = arith.mulf %98, %97 : vector<1x16x16xf32>
    %100 = arith.addf %95, %99 : vector<1x16x16xf32>
    %cst_55 = arith.constant 0.797884583 : f32
    %101 = vector.broadcast %cst_55 : f32 to vector<1x16x16xf32>
    %102 = arith.mulf %101, %100 : vector<1x16x16xf32>
    %103 = math.tanh %102 : vector<1x16x16xf32>
    %cst_56 = arith.constant 1.000000e+00 : f32
    %104 = vector.broadcast %cst_56 : f32 to vector<1x16x16xf32>
    %105 = arith.addf %104, %103 : vector<1x16x16xf32>
    %cst_57 = arith.constant 5.000000e-01 : f32
    %106 = vector.broadcast %cst_57 : f32 to vector<1x16x16xf32>
    %107 = arith.mulf %106, %105 : vector<1x16x16xf32>
    %108 = arith.mulf %95, %107 : vector<1x16x16xf32>
    %109 = arith.addf %108, %5 : vector<1x16x16xf32>
    %c0_58 = arith.constant 0 : index
    %c2_59 = arith.constant 2 : index
    %c0_60 = arith.constant 0 : index
    %c0_61 = arith.constant 0 : index
    %110 = vector.load %arg5[%c0_58, %c2_59, %c0_60, %c0_61] : memref<1x4x16x16xf32, #tpu.memory_space<vmem>>, vector<1x1x16x16xf32>
    %111 = vector.shape_cast %110 : vector<1x1x16x16xf32> to vector<1x16x16xf32>
    %112 = vector.shape_cast %109 : vector<1x16x16xf32> to vector<1x1x16x16xf32>
    tpu.vector_store %arg5[%c0_58, %c2_59, %c0_60, %c0_61], %112 {strides = array<i32>} : memref<1x4x16x16xf32, #tpu.memory_space<vmem>>, vector<1x1x16x16xf32>,
    %c3_62 = arith.constant 3 : index
    %c0_63 = arith.constant 0 : index
    %113 = memref.load %arg3[%c3_62, %c0_63] : memref<4x4xf32, #tpu.memory_space<smem>>
    %114 = vector.broadcast %113 : f32 to vector<1x16x16xf32>
    %115 = arith.mulf %1, %114 : vector<1x16x16xf32>
    %c3_64 = arith.constant 3 : index
    %c1_65 = arith.constant 1 : index
    %116 = memref.load %arg3[%c3_64, %c1_65] : memref<4x4xf32, #tpu.memory_space<smem>>
    %117 = vector.broadcast %116 : f32 to vector<1x16x16xf32>
    %118 = arith.mulf %3, %117 : vector<1x16x16xf32>
    %119 = arith.addf %115, %118 : vector<1x16x16xf32>
    %c3_66 = arith.constant 3 : index
    %c2_67 = arith.constant 2 : index
    %120 = memref.load %arg3[%c3_66, %c2_67] : memref<4x4xf32, #tpu.memory_space<smem>>
    %121 = vector.broadcast %120 : f32 to vector<1x16x16xf32>
    %122 = arith.mulf %5, %121 : vector<1x16x16xf32>
    %123 = arith.addf %119, %122 : vector<1x16x16xf32>
    %c3_68 = arith.constant 3 : index
    %c3_69 = arith.constant 3 : index
    %124 = memref.load %arg3[%c3_68, %c3_69] : memref<4x4xf32, #tpu.memory_space<smem>>
    %125 = vector.broadcast %124 : f32 to vector<1x16x16xf32>
    %126 = arith.mulf %7, %125 : vector<1x16x16xf32>
    %127 = arith.addf %123, %126 : vector<1x16x16xf32>
    %c3_70 = arith.constant 3 : index
    %128 = memref.load %arg4[%c3_70] : memref<4xf32, #tpu.memory_space<smem>>
    %129 = vector.broadcast %128 : f32 to vector<1x16x16xf32>
    %130 = arith.addf %127, %129 : vector<1x16x16xf32>
    %131 = arith.mulf %130, %130 : vector<1x16x16xf32>
    %132 = arith.mulf %130, %131 : vector<1x16x16xf32>
    %cst_71 = arith.constant 4.471500e-02 : f32
    %133 = vector.broadcast %cst_71 : f32 to vector<1x16x16xf32>
    %134 = arith.mulf %133, %132 : vector<1x16x16xf32>
    %135 = arith.addf %130, %134 : vector<1x16x16xf32>
    %cst_72 = arith.constant 0.797884583 : f32
    %136 = vector.broadcast %cst_72 : f32 to vector<1x16x16xf32>
    %137 = arith.mulf %136, %135 : vector<1x16x16xf32>
    %138 = math.tanh %137 : vector<1x16x16xf32>
    %cst_73 = arith.constant 1.000000e+00 : f32
    %139 = vector.broadcast %cst_73 : f32 to vector<1x16x16xf32>
    %140 = arith.addf %139, %138 : vector<1x16x16xf32>
    %cst_74 = arith.constant 5.000000e-01 : f32
    %141 = vector.broadcast %cst_74 : f32 to vector<1x16x16xf32>
    %142 = arith.mulf %141, %140 : vector<1x16x16xf32>
    %143 = arith.mulf %130, %142 : vector<1x16x16xf32>
    %144 = arith.addf %143, %7 : vector<1x16x16xf32>
    %c0_75 = arith.constant 0 : index
    %c3_76 = arith.constant 3 : index
    %c0_77 = arith.constant 0 : index
    %c0_78 = arith.constant 0 : index
    %145 = vector.load %arg5[%c0_75, %c3_76, %c0_77, %c0_78] : memref<1x4x16x16xf32, #tpu.memory_space<vmem>>, vector<1x1x16x16xf32>
    %146 = vector.shape_cast %145 : vector<1x1x16x16xf32> to vector<1x16x16xf32>
    %147 = vector.shape_cast %144 : vector<1x16x16xf32> to vector<1x1x16x16xf32>
    tpu.vector_store %arg5[%c0_75, %c3_76, %c0_77, %c0_78], %147 {strides = array<i32>} : memref<1x4x16x16xf32, #tpu.memory_space<vmem>>, vector<1x1x16x16xf32>,
    return
  }
  func.func @transform_0(%arg0: i32, %arg1: i32) -> (i32, i32, i32, i32) {
    %c0_i32 = arith.constant 0 : i32
    %c0_i32_0 = arith.constant 0 : i32
    %c0_i32_1 = arith.constant 0 : i32
    return %arg0, %c0_i32, %arg1, %c0_i32_0 : i32, i32, i32, i32
  }
  func.func @transform_1(%arg0: i32, %arg1: i32) -> (i32, i32) {
    %c0_i32 = arith.constant 0 : i32
    %c0_i32_0 = arith.constant 0 : i32
    %c0_i32_1 = arith.constant 0 : i32
    return %c0_i32, %c0_i32_0 : i32, i32
  }
  func.func @transform_2(%arg0: i32, %arg1: i32) -> i32 {
    %c0_i32 = arith.constant 0 : i32
    %c0_i32_0 = arith.constant 0 : i32
    return %c0_i32 : i32
  }
  func.func @transform_3(%arg0: i32, %arg1: i32) -> (i32, i32, i32, i32) {
    %c0_i32 = arith.constant 0 : i32
    %c0_i32_0 = arith.constant 0 : i32
    %c0_i32_1 = arith.constant 0 : i32
    return %arg0, %c0_i32, %arg1, %c0_i32_0 : i32, i32, i32, i32
  }
}

</mosaic_0001>

<llo_original>
// kernel: tpu_custom_call.1
$region0: #{tpu_custom_call.1}
  #allocation0 [shape = 'u32[]', space=smem, size = 0x4, offset = 0x4, fixed_abs, tag = 'smem constant byte address 0x4 - core index']
  #allocation1 [shape = 'u32[72,128]{1,0:T(1,128)}', space=vmem, size = 0x9000, scoped, tag = 'internal scratch']
  %s0 = inlined_call_operand.hbm [shape: f32[2,4,16,16], index: 0, kind: input, shape index: {}]
  %s1 = inlined_call_operand.hbm [shape: f32[4,4], index: 1, kind: input, shape index: {}]
  %s2 = inlined_call_operand.vmem [shape: f32[4], index: 2, kind: input, shape index: {}]
  %s3 = inlined_call_operand.hbm [shape: f32[2,4,16,16], index: 3, kind: output, shape index: {}]
  %s4 = sld [smem:[#allocation0]]
  $region57: #{tpu_custom_call.1} parent=0
    _
  %s6 = ssub.s32 1, %s4
  %s7 = scalar_select 0, %s6, %s4
  $region1: #{tpu_custom_call.1} parent=0
    #allocation2 [shape = 'u8[65536]{0}', space=vmem, size = 0x10000, scoped, tag = 'input window, operand 0']
    #allocation3 [shape = 's32[2]{0}', space=sflag, size = 0x8, scoped, tag = 'scoped memory for tpu_custom_call.1']
    #allocation4 [shape = 's32[2]{0}', space=sflag, size = 0x8, scoped, tag = 'scoped memory for tpu_custom_call.1']
    #allocation5 [shape = 's32[2]{0}', space=sflag, size = 0x8, scoped, tag = 'scoped memory for tpu_custom_call.1']
    #allocation6 [shape = 's32[2]{0}', space=sflag, size = 0x8, scoped, tag = 'scoped memory for tpu_custom_call.1']
    #allocation7 [shape = 'u8[2048]{0}', space=smem, size = 0x800, scoped, tag = 'input window, operand 1, single buffered']
    #allocation8 [shape = 'u8[512]{0}', space=smem, size = 0x200, scoped, tag = 'input window, operand 2, single buffered']
    #allocation9 [shape = 'u8[65536]{0}', space=vmem, size = 0x10000, scoped, tag = 'output window, operand 0']
    %8 = vsyncpa [#allocation3], 0
    %s9 = scalar_lea.sflag [#allocation3], 1
    %10 = vsyncpa %s9, 0
    %11 = vsyncpa [#allocation5], 0
    %12 = vsyncpa [#allocation6], 0
    %13 = vsyncpa [#allocation4], 0
    %s14 = scalar_lea.sflag [#allocation4], 1
    %15 = vsyncpa %s14, 0
    loop: start=0, step=1, limit=4
    $region2: #{tpu_custom_call.1} parent=1 // loop_pre_header
      _
    $region3: #{tpu_custom_call.1} parent=1 // loop_header
      %s17 = sphi 0, %s21
      %p18 = scmp.ge.s32.totalorder %s17, 4
      %s24 = sphi 0, %s36
      %s25 = sphi 0, %s32
      %s26 = sphi 0, %s24
      %s27 = sphi 0, %s25
      %s28 = sphi 0, %s26
      %s29 = sphi 0, %s27
      %s41 = sphi 0, %s43
      %s44 = sphi 0, %s41
      %s45 = sphi 0, %s44
      %s61 = sphi 0, %s45
      %s65 = sphi 0, %s65
      %s67 = sphi 0, %s65
      %s68 = sphi 0, %s67
      %s82 = sphi 0, %s68
      %s86 = sphi 0, %s86
      %s88 = sphi 0, %s86
      %s89 = sphi 0, %s88
      %s103 = sphi 0, %s89
      %s111 = sphi 0, %s113
      %s114 = sphi 0, %s111
      %s115 = sphi 0, %s114
      %s131 = sphi 0, %s115
    $region4: #{tpu_custom_call.1} parent=1 // loop_header_branch
      %20 = sbr.rel (%p18) target = $region8
    $region5: #{tpu_custom_call.1} parent=1 // loop_body
      %s22 = ssub.s32 %s17, 1
      %s23 = ssub.s32 %s17, 2
      %s30 = sadd.s32 1, %s25
      %p31 = scmp.ge.s32.totalorder %s30, 1
      %s32 = scalar_select %p31, 0, %s30
      %s33 = sadd.s32 1, %s24
      %s34 = scalar_select %p31, %s33, %s24
      %p35 = scmp.ge.s32.totalorder %s34, 2
      %s36 = scalar_select %p35, 0, %s34
      %s37 = ssub.s32 %s24, %s36
      %s38 = ssub.s32 %s25, %s32
      %s39 = sor.u32 %s37, %s38
      %p40 = scmp.eq.s32.totalorder %s39, 0
      %s42 = sadd.s32 %s41, 1
      %s43 = scalar_select %p40, %s41, %s42
      %p46 = pneg %p40
      %p47 = scmp.eq.s32.totalorder %s17, 1
      %p48 = por %p46, %p47
      %p49 = scmp.ne.s32.totalorder %s41, %s44
      %p50 = scmp.eq.s32.totalorder %s17, 0
      %p51 = por %p49, %p50
      %p52 = scmp.ne.s32.totalorder %s41, %s44
      %p53 = scmp.eq.s32.totalorder %s22, 1
      %p54 = por %p52, %p53
      %p55 = scmp.ne.s32.totalorder %s44, %s45
      %p56 = scmp.eq.s32.totalorder %s22, 0
      %p57 = por %p55, %p56
      %p58 = scmp.ne.s32.totalorder %s44, %s45
      %p59 = scmp.eq.s32.totalorder %s23, 1
      %p60 = por %p58, %p59
      %p62 = scmp.ne.s32.totalorder %s45, %s61
      %p63 = scmp.eq.s32.totalorder %s23, 0
      %p64 = por %p62, %p63
      %s66 = sadd.s32 %s65, 1
      %p69 = scmp.eq.s32.totalorder %s17, 1
      %p70 = scmp.ne.s32.totalorder %s65, %s67
      %p71 = scmp.eq.s32.totalorder %s17, 0
      %p72 = por %p70, %p71
      %p73 = scmp.ne.s32.totalorder %s65, %s67
      %p74 = scmp.eq.s32.totalorder %s22, 1
      %p75 = por %p73, %p74
      %p76 = scmp.ne.s32.totalorder %s67, %s68
      %p77 = scmp.eq.s32.totalorder %s22, 0
      %p78 = por %p76, %p77
      %p79 = scmp.ne.s32.totalorder %s67, %s68
      %p80 = scmp.eq.s32.totalorder %s23, 1
      %p81 = por %p79, %p80
      %p83 = scmp.ne.s32.totalorder %s68, %s82
      %p84 = scmp.eq.s32.totalorder %s23, 0
      %p85 = por %p83, %p84
      %s87 = sadd.s32 %s86, 1
      %p90 = scmp.eq.s32.totalorder %s17, 1
      %p91 = scmp.ne.s32.totalorder %s86, %s88
      %p92 = scmp.eq.s32.totalorder %s17, 0
      %p93 = por %p91, %p92
      %p94 = scmp.ne.s32.totalorder %s86, %s88
      %p95 = scmp.eq.s32.totalorder %s22, 1
      %p96 = por %p94, %p95
      %p97 = scmp.ne.s32.totalorder %s88, %s89
      %p98 = scmp.eq.s32.totalorder %s22, 0
      %p99 = por %p97, %p98
      %p100 = scmp.ne.s32.totalorder %s88, %s89
      %p101 = scmp.eq.s32.totalorder %s23, 1
      %p102 = por %p100, %p101
      %p104 = scmp.ne.s32.totalorder %s89, %s103
      %p105 = scmp.eq.s32.totalorder %s23, 0
      %p106 = por %p104, %p105
      %s107 = ssub.s32 %s24, %s36
      %s108 = ssub.s32 %s25, %s32
      %s109 = sor.u32 %s107, %s108
      %p110 = scmp.eq.s32.totalorder %s109, 0
      %s112 = sadd.s32 %s111, 1
      %s113 = scalar_select %p110, %s111, %s112
      %p116 = pneg %p110
      %p117 = scmp.eq.s32.totalorder %s17, 1
      %p118 = por %p116, %p117
      %p119 = scmp.ne.s32.totalorder %s111, %s114
      %p120 = scmp.eq.s32.totalorder %s17, 0
      %p121 = por %p119, %p120
      %p122 = scmp.ne.s32.totalorder %s111, %s114
      %p123 = scmp.eq.s32.totalorder %s22, 1
      %p124 = por %p122, %p123
      %p125 = scmp.ne.s32.totalorder %s114, %s115
      %p126 = scmp.eq.s32.totalorder %s22, 0
      %p127 = por %p125, %p126
      %p128 = scmp.ne.s32.totalorder %s114, %s115
      %p129 = scmp.eq.s32.totalorder %s23, 1
      %p130 = por %p128, %p129
      %p132 = scmp.ne.s32.totalorder %s115, %s131
      %p133 = scmp.eq.s32.totalorder %s23, 0
      %p134 = por %p132, %p133
      %p135 = scmp.le.s32.totalorder 1, %s17
      %p136 = scmp.lt.s32.totalorder %s17, 3
      %p137 = pnand %p135, %p136
      %p138 = pneg %p137
      // Predicated region
      $region9: #{tpu_custom_call.1} parent=5 // pred_check
        _
      $region10: #{tpu_custom_call.1} parent=5 // pred_check_branch
        %140 = sbr.rel (%p137) target = $region12
      $region11: #{tpu_custom_call.1} parent=5 // pred_region
        %s141 = ssub.s32 %s17, 1
        // Predicated region
        $region13: #{tpu_custom_call.1} parent=11 // pred_check
          %p142 = pneg %p78
        $region14: #{tpu_custom_call.1} parent=11 // pred_check_branch
          %144 = sbr.rel (%p142) target = $region16
        $region15: #{tpu_custom_call.1} parent=11 // pred_region
          %146 = vsyncadd [#allocation5], 0
          %s148 = sshll.u32 %s1, 4
          %s149 = int_to_ptr.hbm [resolvable:$true] %s148
          %151 = dma.hbm_to_smem %s149, 64, [#allocation7], [#allocation5]
        $region16: #{tpu_custom_call.1} parent=11 // pred_fallthru
          _
        // Predicated region
        $region17: #{tpu_custom_call.1} parent=11 // pred_check
          %p152 = pneg %p99
        $region18: #{tpu_custom_call.1} parent=11 // pred_check_branch
          %154 = sbr.rel (%p152) target = $region20
        $region19: #{tpu_custom_call.1} parent=11 // pred_region
          %156 = vsyncadd [#allocation6], 0
          %s158 = sshll.u32 %s2, 4
          %s159 = int_to_ptr.vmem [resolvable:$true] %s158
          %161 = dma.vmem_to_smem %s159, 16, [#allocation8], [#allocation6]
        $region20: #{tpu_custom_call.1} parent=11 // pred_fallthru
          _
      $region12: #{tpu_custom_call.1} parent=5 // pred_fallthru
        _
      %p162 = scmp.lt.s32.totalorder %s17, 2
      // Predicated region
      $region21: #{tpu_custom_call.1} parent=5 // pred_check
        %p163 = pneg %p162
      $region22: #{tpu_custom_call.1} parent=5 // pred_check_branch
        %165 = sbr.rel (%p163) target = $region24
      $region23: #{tpu_custom_call.1} parent=5 // pred_region
        // Predicated region
        $region25: #{tpu_custom_call.1} parent=23 // pred_check
          %p166 = pneg %p51
        $region26: #{tpu_custom_call.1} parent=23 // pred_check_branch
          %168 = sbr.rel (%p166) target = $region28
        $region27: #{tpu_custom_call.1} parent=23 // pred_region
          %s169 = sand.u32 %s41, 1
          %s170 = scalar_lea.sflag [#allocation3], %s169
          %s171 = sand.u32 %s41, 1
          %s172 = smul.addr %s171, 64
          %s173 = scalar_lea.vmem [#allocation2], %s172
          %s174 = smul.u32 2, %s25
          %176 = vsyncadd %s170, 0
          %s177 = smul.addr %s24, 8
          %s178 = sadd.s32 %s174, %s177
          %s179 = smul.addr %s178, 8
          %s180 = scalar_lea.hbm %s0, %s179
          %s181 = sshll.u32 %s180, 4
          %s182 = int_to_ptr.hbm [resolvable:$true] %s181
          %s183 = sshll.u32 %s173, 4
          %s184 = int_to_ptr.vmem [resolvable:$true] %s183
          %189 = dma.hbm_to_vmem [thread:$0]  %s182, 1024, %s184, %s170, 128, 128, 8
        $region28: #{tpu_custom_call.1} parent=23 // pred_fallthru
          _
      $region24: #{tpu_custom_call.1} parent=5 // pred_fallthru
        _
      %p190 = scmp.le.s32.totalorder 1, %s17
      %p191 = scmp.lt.s32.totalorder %s17, 3
      %p192 = pnand %p190, %p191
      %p193 = pneg %p192
      // Predicated region
      $region29: #{tpu_custom_call.1} parent=5 // pred_check
        _
      $region30: #{tpu_custom_call.1} parent=5 // pred_check_branch
        %195 = sbr.rel (%p192) target = $region32
      $region31: #{tpu_custom_call.1} parent=5 // pred_region
        %s196 = ssub.s32 %s17, 1
        %s197 = sand.u32 %s44, 1
        %s198 = scalar_lea.sflag [#allocation3], %s197
        %s199 = sand.u32 %s44, 1
        %s200 = smul.addr %s199, 64
        %s201 = scalar_lea.vmem [#allocation2], %s200
        // Predicated region
        $region33: #{tpu_custom_call.1} parent=31 // pred_check
          %p202 = pneg %p57
        $region34: #{tpu_custom_call.1} parent=31 // pred_check_branch
          %204 = sbr.rel (%p202) target = $region36
        $region35: #{tpu_custom_call.1} parent=31 // pred_region
          %206 = dma.done %s198, 1024
        $region36: #{tpu_custom_call.1} parent=31 // pred_fallthru
          _
        // Predicated region
        $region37: #{tpu_custom_call.1} parent=31 // pred_check
          %p207 = pneg %p78
        $region38: #{tpu_custom_call.1} parent=31 // pred_check_branch
          %209 = sbr.rel (%p207) target = $region40
        $region39: #{tpu_custom_call.1} parent=31 // pred_region
          %211 = dma.done [#allocation5], 64
        $region40: #{tpu_custom_call.1} parent=31 // pred_fallthru
          _
        // Predicated region
        $region41: #{tpu_custom_call.1} parent=31 // pred_check
          %p212 = pneg %p99
        $region42: #{tpu_custom_call.1} parent=31 // pred_check_branch
          %214 = sbr.rel (%p212) target = $region44
        $region43: #{tpu_custom_call.1} parent=31 // pred_region
          %216 = dma.done [#allocation6], 16
        $region44: #{tpu_custom_call.1} parent=31 // pred_fallthru
          _
        %217 = sfence
        %s218 = sand.u32 %s44, 1
        %s219 = scalar_lea.sflag [#allocation3], %s218
        %s220 = sand.u32 %s44, 1
        %s221 = smul.addr %s220, 64
        %s222 = scalar_lea.vmem [#allocation2], %s221
        %p223 = pneg %p57
        %p224 = pneg %p54
        %p225 = pneg %p78
        %p226 = pneg %p75
        %p227 = pneg %p99
        %p228 = pneg %p96
        %p229 = pneg %p127
        %p230 = pneg %p124
        %s231 = sand.u32 %s114, 1
        %s232 = scalar_lea.sflag [#allocation4], %s231
        %s233 = sand.u32 %s114, 1
        %s234 = smul.addr %s233, 64
        %s235 = scalar_lea.vmem [#allocation9], %s234
        %s236 = smul.u32 2, %s27
        %s237 = smul.u32 2, %s27
        %v238 = vld [vmem:[%s201] sm:$0xff]
        %v239 = vld [vmem:[%s201 + $0x8] sm:$0xff]
        %s240 = scalar_lea.vmem %s201, 16 [#allocation2]
        %v241 = vld [vmem:[%s240] sm:$0xff]
        %v242 = vld [vmem:[%s240 + $0x8] sm:$0xff]
        %s243 = scalar_lea.vmem %s201, 32 [#allocation2]
        %v244 = vld [vmem:[%s243] sm:$0xff]
        %v245 = vld [vmem:[%s243 + $0x8] sm:$0xff]
        %s246 = scalar_lea.vmem %s201, 48 [#allocation2]
        %v247 = vld [vmem:[%s246] sm:$0xff]
        %v248 = vld [vmem:[%s246 + $0x8] sm:$0xff]
        %s249 = sld [smem:[#allocation7]]
        %v250 = vstv %s249
        %v251 = vmul.f32 %v238, %v250
        %v252 = vmul.f32 %v239, %v250
        %s253 = sld [smem:[#allocation7 + $0x1]]
        %v254 = vstv %s253
        %v255 = vmul.f32 %v241, %v254
        %v256 = vmul.f32 %v242, %v254
        %v257 = vadd.f32 %v251, %v255
        %v258 = vadd.f32 %v252, %v256
        %s259 = sld [smem:[#allocation7 + $0x2]]
        %v260 = vstv %s259
        %v261 = vmul.f32 %v244, %v260
        %v262 = vmul.f32 %v245, %v260
        %v263 = vadd.f32 %v257, %v261
        %v264 = vadd.f32 %v258, %v262
        %s265 = sld [smem:[#allocation7 + $0x3]]
        %v266 = vstv %s265
        %v267 = vmul.f32 %v247, %v266
        %v268 = vmul.f32 %v248, %v266
        %v269 = vadd.f32 %v263, %v267
        %v270 = vadd.f32 %v264, %v268
        %s271 = sld [smem:[#allocation8]]
        %v272 = vstv %s271
        %v273 = vadd.f32 %v269, %v272
        %v274 = vadd.f32 %v270, %v272
        %v275 = vmul.f32 %v273, %v273
        %v276 = vmul.f32 %v274, %v274
        %v277 = vmul.f32 %v273, %v275
        %v278 = vmul.f32 %v274, %v276
        %v279 = vmul.f32 %v277, 0.044715
        %v280 = vmul.f32 %v278, 0.044715
        %v281 = vadd.f32 %v273, %v279
        %v282 = vadd.f32 %v274, %v280
        %v283 = vmul.f32 %v281, 0.7978846
        %v284 = vmul.f32 %v282, 0.7978846
        %v285 = vtanh.pop %v283
        %v286 = vtanh.pop %v284
        %v287 = vadd.f32 %v285, 1.0
        %v288 = vadd.f32 %v286, 1.0
        %v289 = vmul.f32 %v287, 0.5
        %v290 = vmul.f32 %v288, 0.5
        %v291 = vmul.f32 %v273, %v289
        %v292 = vmul.f32 %v274, %v290
        %v293 = vadd.f32 %v291, %v238
        %v294 = vadd.f32 %v292, %v239
        %vm295 = vcmask 130048
        %296 = vst.msk [vmem:[%s235] sm:$0xff] %vm295, %v293
        %297 = vst.msk [vmem:[%s235 + $0x8] sm:$0xff] %vm295, %v294
        %s298 = sld [smem:[#allocation7 + $0x80]]
        %v299 = vstv %s298
        %v300 = vmul.f32 %v238, %v299
        %v301 = vmul.f32 %v239, %v299
        %s302 = sld [smem:[#allocation7 + $0x81]]
        %v303 = vstv %s302
        %v304 = vmul.f32 %v241, %v303
        %v305 = vmul.f32 %v242, %v303
        %v306 = vadd.f32 %v300, %v304
        %v307 = vadd.f32 %v301, %v305
        %s308 = sld [smem:[#allocation7 + $0x82]]
        %v309 = vstv %s308
        %v310 = vmul.f32 %v244, %v309
        %v311 = vmul.f32 %v245, %v309
        %v312 = vadd.f32 %v306, %v310
        %v313 = vadd.f32 %v307, %v311
        %s314 = sld [smem:[#allocation7 + $0x83]]
        %v315 = vstv %s314
        %v316 = vmul.f32 %v247, %v315
        %v317 = vmul.f32 %v248, %v315
        %v318 = vadd.f32 %v312, %v316
        %v319 = vadd.f32 %v313, %v317
        %s320 = sld [smem:[#allocation8 + $0x1]]
        %v321 = vstv %s320
        %v322 = vadd.f32 %v318, %v321
        %v323 = vadd.f32 %v319, %v321
        %v324 = vmul.f32 %v322, %v322
        %v325 = vmul.f32 %v323, %v323
        %v326 = vmul.f32 %v322, %v324
        %v327 = vmul.f32 %v323, %v325
        %v328 = vmul.f32 %v326, 0.044715
        %v329 = vmul.f32 %v327, 0.044715
        %v330 = vadd.f32 %v322, %v328
        %v331 = vadd.f32 %v323, %v329
        %v332 = vmul.f32 %v330, 0.7978846
        %v333 = vmul.f32 %v331, 0.7978846
        %v334 = vtanh.pop %v332
        %v335 = vtanh.pop %v333
        %v336 = vadd.f32 %v334, 1.0
        %v337 = vadd.f32 %v335, 1.0
        %v338 = vmul.f32 %v336, 0.5
        %v339 = vmul.f32 %v337, 0.5
        %v340 = vmul.f32 %v322, %v338
        %v341 = vmul.f32 %v323, %v339
        %v342 = vadd.f32 %v340, %v241
        %v343 = vadd.f32 %v341, %v242
        %s344 = scalar_lea.vmem %s235, 16 [#allocation9]
        %345 = vst.msk [vmem:[%s344] sm:$0xff] %vm295, %v342
        %346 = vst.msk [vmem:[%s344 + $0x8] sm:$0xff] %vm295, %v343
        %s347 = sld [smem:[#allocation7 + $0x100]]
        %v348 = vstv %s347
        %v349 = vmul.f32 %v238, %v348
        %v350 = vmul.f32 %v239, %v348
        %s351 = sld [smem:[#allocation7 + $0x101]]
        %v352 = vstv %s351
        %v353 = vmul.f32 %v241, %v352
        %v354 = vmul.f32 %v242, %v352
        %v355 = vadd.f32 %v349, %v353
        %v356 = vadd.f32 %v350, %v354
        %s357 = sld [smem:[#allocation7 + $0x102]]
        %v358 = vstv %s357
        %v359 = vmul.f32 %v244, %v358
        %v360 = vmul.f32 %v245, %v358
        %v361 = vadd.f32 %v355, %v359
        %v362 = vadd.f32 %v356, %v360
        %s363 = sld [smem:[#allocation7 + $0x103]]
        %v364 = vstv %s363
        %v365 = vmul.f32 %v247, %v364
        %v366 = vmul.f32 %v248, %v364
        %v367 = vadd.f32 %v361, %v365
        %v368 = vadd.f32 %v362, %v366
        %s369 = sld [smem:[#allocation8 + $0x2]]
        %v370 = vstv %s369
        %v371 = vadd.f32 %v367, %v370
        %v372 = vadd.f32 %v368, %v370
        %v373 = vmul.f32 %v371, %v371
        %v374 = vmul.f32 %v372, %v372
        %v375 = vmul.f32 %v371, %v373
        %v376 = vmul.f32 %v372, %v374
        %v377 = vmul.f32 %v375, 0.044715
        %v378 = vmul.f32 %v376, 0.044715
        %v379 = vadd.f32 %v371, %v377
        %v380 = vadd.f32 %v372, %v378
        %v381 = vmul.f32 %v379, 0.7978846
        %v382 = vmul.f32 %v380, 0.7978846
        %v383 = vtanh.pop %v381
        %v384 = vtanh.pop %v382
        %v385 = vadd.f32 %v383, 1.0
        %v386 = vadd.f32 %v384, 1.0
        %v387 = vmul.f32 %v385, 0.5
        %v388 = vmul.f32 %v386, 0.5
        %v389 = vmul.f32 %v371, %v387
        %v390 = vmul.f32 %v372, %v388
        %v391 = vadd.f32 %v389, %v244
        %v392 = vadd.f32 %v390, %v245
        %s393 = scalar_lea.vmem %s235, 32 [#allocation9]
        %394 = vst.msk [vmem:[%s393] sm:$0xff] %vm295, %v391
        %395 = vst.msk [vmem:[%s393 + $0x8] sm:$0xff] %vm295, %v392
        %s396 = sld [smem:[#allocation7 + $0x180]]
        %v397 = vstv %s396
        %v398 = vmul.f32 %v238, %v397
        %v399 = vmul.f32 %v239, %v397
        %s400 = sld [smem:[#allocation7 + $0x181]]
        %v401 = vstv %s400
        %v402 = vmul.f32 %v241, %v401
        %v403 = vmul.f32 %v242, %v401
        %v404 = vadd.f32 %v398, %v402
        %v405 = vadd.f32 %v399, %v403
        %s406 = sld [smem:[#allocation7 + $0x182]]
        %v407 = vstv %s406
        %v408 = vmul.f32 %v244, %v407
        %v409 = vmul.f32 %v245, %v407
        %v410 = vadd.f32 %v404, %v408
        %v411 = vadd.f32 %v405, %v409
        %s412 = sld [smem:[#allocation7 + $0x183]]
        %v413 = vstv %s412
        %v414 = vmul.f32 %v247, %v413
        %v415 = vmul.f32 %v248, %v413
        %v416 = vadd.f32 %v410, %v414
        %v417 = vadd.f32 %v411, %v415
        %s418 = sld [smem:[#allocation8 + $0x3]]
        %v419 = vstv %s418
        %v420 = vadd.f32 %v416, %v419
        %v421 = vadd.f32 %v417, %v419
        %v422 = vmul.f32 %v420, %v420
        %v423 = vmul.f32 %v421, %v421
        %v424 = vmul.f32 %v420, %v422
        %v425 = vmul.f32 %v421, %v423
        %v426 = vmul.f32 %v424, 0.044715
        %v427 = vmul.f32 %v425, 0.044715
        %v428 = vadd.f32 %v420, %v426
        %v429 = vadd.f32 %v421, %v427
        %v430 = vmul.f32 %v428, 0.7978846
        %v431 = vmul.f32 %v429, 0.7978846
        %v432 = vtanh.pop %v430
        %v433 = vtanh.pop %v431
        %v434 = vadd.f32 %v432, 1.0
        %v435 = vadd.f32 %v433, 1.0
        %v436 = vmul.f32 %v434, 0.5
        %v437 = vmul.f32 %v435, 0.5
        %v438 = vmul.f32 %v420, %v436
        %v439 = vmul.f32 %v421, %v437
        %v440 = vadd.f32 %v438, %v247
        %v441 = vadd.f32 %v439, %v248
        %s442 = scalar_lea.vmem %s235, 48 [#allocation9]
        %443 = vst.msk [vmem:[%s442] sm:$0xff] %vm295, %v440
        %444 = vst.msk [vmem:[%s442 + $0x8] sm:$0xff] %vm295, %v441
        %s445 = sand.u32 %s114, 1
        %s446 = scalar_lea.sflag [#allocation4], %s445
        %s447 = sand.u32 %s114, 1
        %s448 = smul.addr %s447, 64
        %s449 = scalar_lea.vmem [#allocation9], %s448
        // Predicated region
        $region45: #{tpu_custom_call.1} parent=31 // pred_check
          %p450 = pneg %p124
        $region46: #{tpu_custom_call.1} parent=31 // pred_check_branch
          %452 = sbr.rel (%p450) target = $region48
        $region47: #{tpu_custom_call.1} parent=31 // pred_region
          %s453 = smul.u32 2, %s27
          %455 = vsyncadd %s446, 0
          %s456 = smul.addr %s26, 8
          %s457 = sadd.s32 %s453, %s456
          %s458 = smul.addr %s457, 8
          %s459 = scalar_lea.hbm %s3, %s458
          %s460 = sshll.u32 %s449, 4
          %s461 = int_to_ptr.vmem [resolvable:$true] %s460
          %s462 = sshll.u32 %s459, 4
          %s463 = int_to_ptr.hbm [resolvable:$true] %s462
          %468 = dma.vmem_to_hbm [thread:$0]  %s461, 1024, %s463, %s446, 128, 128, 8
        $region48: #{tpu_custom_call.1} parent=31 // pred_fallthru
          _
      $region32: #{tpu_custom_call.1} parent=5 // pred_fallthru
        _
      %p469 = scmp.le.s32.totalorder 2, %s17
      // Predicated region
      $region49: #{tpu_custom_call.1} parent=5 // pred_check
        %p470 = pneg %p469
      $region50: #{tpu_custom_call.1} parent=5 // pred_check_branch
        %472 = sbr.rel (%p470) target = $region52
      $region51: #{tpu_custom_call.1} parent=5 // pred_region
        %s473 = ssub.s32 %s17, 2
        // Predicated region
        $region53: #{tpu_custom_call.1} parent=51 // pred_check
          %p474 = pneg %p130
        $region54: #{tpu_custom_call.1} parent=51 // pred_check_branch
          %476 = sbr.rel (%p474) target = $region56
        $region55: #{tpu_custom_call.1} parent=51 // pred_region
          %s477 = sand.u32 %s115, 1
          %s478 = scalar_lea.sflag [#allocation4], %s477
          %s479 = sand.u32 %s115, 1
          %s480 = smul.addr %s479, 64
          %s481 = scalar_lea.vmem [#allocation9], %s480
          %483 = dma.done %s478, 1024
        $region56: #{tpu_custom_call.1} parent=51 // pred_fallthru
          _
      $region52: #{tpu_custom_call.1} parent=5 // pred_fallthru
        _
    $region6: #{tpu_custom_call.1} parent=1 // loop_footer
      %s21 = sadd.s32 1, %s17
    $region7: #{tpu_custom_call.1} parent=1 // loop_footer_branch
      %16 = sbr.rel target = $region3
    $region8: #{tpu_custom_call.1} parent=1 // loop_exit
      _
    %484 = vsyncpa [#allocation3], 1
    %s485 = scalar_lea.sflag [#allocation3], 1
    %486 = vsyncpa %s485, 1
    %487 = vsyncpa [#allocation4], 1
    %s488 = scalar_lea.sflag [#allocation4], 1
    %489 = vsyncpa %s488, 1
    %490 = vsyncpa [#allocation5], 1
    %s491 = scalar_lea.sflag [#allocation5], 1
    %492 = vsyncpa %s491, 1
    %493 = vsyncpa [#allocation6], 1
    %s494 = scalar_lea.sflag [#allocation6], 1
    %495 = vsyncpa %s494, 1

</llo_original>
